<compile_context>
chip_gen: v6e
topology: v6e:2x2x1
jax: 0.10.0
libtpu: 0.0.40
codegen_flags: <defaults>
</compile_context>

<pallas_src>
import functools

import jax
import jax.numpy as jnp
from jax import lax
from jax.experimental import pallas as pl
from jax.experimental.pallas import tpu as pltpu

_LANE = 128
_MAX_COL_TILE = 2048        # lanes per input block (multiple of 128)


def _sublane_base(dtype) -> int:
    # Packed-sublane minimum: f32 -> 8, bf16 -> 16, int8/fp8 -> 32.
    return max(8, 32 // jnp.dtype(dtype).itemsize)


def _round_up(n: int, m: int) -> int:
    return ((n + m - 1) // m) * m


def _cdiv(a: int, b: int) -> int:
    return -(-a // b)


def _pick_unroll(trips: int, cap: int = 8) -> int:
    """Largest divisor of trips that is <= cap (keeps lax.fori_loop unroll exact)."""
    for u in range(min(trips, cap), 0, -1):
        if trips % u == 0:
            return u
    return 1


def _split_tile(dim: int, tile: int, base: int, parts: int) -> int:
    """Shrink `tile` so `dim` spans at least `parts` tiles (best effort)."""
    if _cdiv(dim, tile) >= parts:
        return tile
    want = _round_up(_cdiv(dim, parts), base)
    return max(base, min(tile, want))


def _target_config():
    """(block_bytes_target, two_tensorcores) per TPU generation (best effort)."""
    kind = ""
    try:
        kind = jax.devices()[0].device_kind.lower()
    except Exception:
        pass
    if "v7" in kind:
        return 8 << 20, True        # 2 TCs/chip, 64 MiB VMEM/TC, 3.2 TB/s HBM
    if "v6" in kind:
        return 6 << 20, False
    if "v5p" in kind or "v4" in kind:
        return 6 << 20, True        # megacore: 2 TCs
    return 4 << 20, False           # v5e / unknown: stay inside 16 MiB scoped default


def _sum_rows_kernel(x_ref, o_ref, acc_ref, *, rows, slice_rows, unroll):
    """Reduce over rows (axis=0). grid = (col tiles [parallel], row tiles [reduction])."""
    row_tile, col_tile = x_ref.shape
    acc_dtype = acc_ref.dtype
    k = pl.program_id(1)
    nk = pl.num_programs(1)
    trips = row_tile // slice_rows

    @pl.when(k == 0)
    def _init():
        acc_ref[...] = jnp.zeros_like(acc_ref)

    def accumulate(mask_rows):
        def body(i, carry):
            r0 = pl.multiple_of(i * slice_rows, slice_rows)
            xs = x_ref[pl.ds(r0, slice_rows), :].astype(acc_dtype)
            if mask_rows:
                grow = (k * row_tile + r0
                        + lax.broadcasted_iota(jnp.int32, (slice_rows, col_tile), 0))
                xs = jnp.where(grow < rows, xs, 0)
            # Fold the (widened, unpacked) slice down to 8 sublanes with aligned
            # static-slice VPU adds (no reshape / relayout).
            s = xs[0:8, :]
            for g in range(1, slice_rows // 8):
                s = s + xs[g * 8:(g + 1) * 8, :]
            return carry + s

        part = lax.fori_loop(0, trips, body,
                             jnp.zeros((8, col_tile), acc_dtype), unroll=unroll)
        acc_ref[...] += part

    if rows % row_tile != 0:
        # Only the last row tile can be ragged; mask only there.
        @pl.when(k == nk - 1)
        def _ragged():
            accumulate(True)

        @pl.when(k != nk - 1)
        def _full():
            accumulate(False)
    else:
        accumulate(False)

    @pl.when(k == nk - 1)
    def _finalize():
        # Single cross-sublane reduce + cast + store per column tile.
        o_ref[...] = jnp.sum(acc_ref[...], axis=0, keepdims=True).astype(o_ref.dtype)


def _sum_cols_kernel(x_ref, o_ref, acc_ref, *, cols, unroll):
    """Reduce over columns (axis=1). grid = (row tiles [parallel], col tiles [reduction])."""
    row_tile, col_tile = x_ref.shape
    acc_dtype = acc_ref.dtype
    k = pl.program_id(1)
    nk = pl.num_programs(1)
    trips = col_tile // _LANE

    @pl.when(k == 0)
    def _init():
        acc_ref[...] = jnp.zeros_like(acc_ref)

    def accumulate(mask_cols):
        def body(i, carry):
            c0 = pl.multiple_of(i * _LANE, _LANE)
            xs = x_ref[:, pl.ds(c0, _LANE)].astype(acc_dtype)
            if mask_cols:
                gcol = (k * col_tile + c0
                        + lax.broadcasted_iota(jnp.int32, (row_tile, _LANE), 1))
                xs = jnp.where(gcol < cols, xs, 0)
            acc_ref[...] += xs
            return carry

        lax.fori_loop(0, trips, body, 0, unroll=unroll)

    if cols % col_tile != 0:
        # Only the last column tile can be ragged; mask only there.
        @pl.when(k == nk - 1)
        def _ragged():
            accumulate(True)

        @pl.when(k != nk - 1)
        def _full():
            accumulate(False)
    else:
        accumulate(False)

    @pl.when(k == nk - 1)
    def _finalize():
        # Single cross-lane reduce + cast + store per row tile.
        o_ref[...] = jnp.sum(acc_ref[...], axis=1, keepdims=True).astype(o_ref.dtype)


@functools.partial(jax.jit, static_argnames=("axis",))
def pool_reduce(x: jax.Array, axis: int = 0) -> jax.Array:
    """Sum a dense 2-D matrix over `axis` (dense equivalent of torch.sparse.sum)."""
    assert x.ndim == 2, "PoolReduce kernel expects a 2-D matrix"
    assert axis in (0, 1)

    R, C = x.shape
    dtype = x.dtype
    itemsize = jnp.dtype(dtype).itemsize
    sub = _sublane_base(dtype)
    acc_dtype = jnp.int32 if jnp.issubdtype(dtype, jnp.integer) else jnp.float32

    block_target, two_cores = _target_config()

    # Lane (column) tile first, then the sublane (row) budget for ~block_target bytes.
    col_tile = min(_round_up(C, _LANE), _MAX_COL_TILE)
    if axis == 0 and two_cores:
        col_tile = _split_tile(C, col_tile, _LANE, 2)     # keep both TCs busy
    max_rows = max(sub, (block_target // (col_tile * itemsize)) // sub * sub)
    row_tile = min(_round_up(R, sub), max_rows)
    if axis == 1 and two_cores:
        row_tile = _split_tile(R, row_tile, sub, 2)       # keep both TCs busy

    block_bytes = row_tile * col_tile * itemsize

    if axis == 0:
        grid = (_cdiv(C, col_tile), _cdiv(R, row_tile))   # (parallel, reduction)
        kernel = functools.partial(
            _sum_rows_kernel, rows=R, slice_rows=sub,
            unroll=_pick_unroll(row_tile // sub))
        acc_shape = (8, col_tile)
        out_shape = jax.ShapeDtypeStruct((1, C), dtype)
        in_specs = [pl.BlockSpec((row_tile, col_tile), lambda j, k: (k, j))]
        out_specs = pl.BlockSpec((1, col_tile), lambda j, k: (0, j))
    else:
        grid = (_cdiv(R, row_tile), _cdiv(C, col_tile))   # (parallel, reduction)
        kernel = functools.partial(
            _sum_cols_kernel, cols=C,
            unroll=_pick_unroll(col_tile // _LANE))
        acc_shape = (row_tile, _LANE)
        out_shape = jax.ShapeDtypeStruct((R, 1), dtype)
        in_specs = [pl.BlockSpec((row_tile, col_tile), lambda i, k: (i, k))]
        out_specs = pl.BlockSpec((row_tile, 1), lambda i, k: (i, 0))

    acc_bytes = acc_shape[0] * acc_shape[1] * 4
    vmem_limit = int(min(48 << 20, max(24 << 20, 3 * block_bytes + acc_bytes + (4 << 20))))

    out2d = pl.pallas_call(
        kernel,
        out_shape=out_shape,
        grid_spec=pltpu.PrefetchScalarGridSpec(
            num_scalar_prefetch=0,
            grid=grid,
            in_specs=in_specs,
            out_specs=out_specs,
            scratch_shapes=[pltpu.VMEM(acc_shape, acc_dtype)],
        ),
        compiler_params=pltpu.CompilerParams(
            dimension_semantics=("parallel", "arbitrary"),
            vmem_limit_bytes=vmem_limit,
        ),
    )(x)

    return out2d[0, :] if axis == 0 else out2d[:, 0]


if __name__ == "__main__":
    key = jax.random.PRNGKey(0)

    def make_sparse_like(k, shape, dtype=jnp.float32):
        # Dense storage with ~75% explicit zeros == what .to_dense() of the
        # sparse input looks like.
        k_val, k_mask = jax.random.split(k)
        vals = jax.random.normal(k_val, shape, dtype=jnp.float32)
        mask = jax.random.uniform(k_mask, shape) < 0.25
        return jnp.where(mask, vals, 0.0).astype(dtype)

    k1, k2, k3 = jax.random.split(key, 3)

    # Tile-aligned f32 (module default axis=0, plus axis=1).
    x = make_sparse_like(k1, (64, 128))
    for ax in (0, 1):
        out = jax.block_until_ready(pool_reduce(x, axis=ax))
        ref = jnp.sum(x, axis=ax)
        assert out.shape == ref.shape and out.dtype == ref.dtype
        assert jnp.allclose(out, ref, atol=1e-5, rtol=1e-5)

    # Non-tile-aligned f32 exercises in-kernel masking of ragged row/col tiles.
    y = make_sparse_like(k2, (50, 200))
    for ax in (0, 1):
        out = jax.block_until_ready(pool_reduce(y, axis=ax))
        ref = jnp.sum(y, axis=ax)
        assert out.shape == ref.shape
        assert jnp.allclose(out, ref, atol=1e-5, rtol=1e-5)

    # bf16 exercises the packed-sublane slice path + f32 accumulation.
    z = make_sparse_like(k3, (40, 300), dtype=jnp.bfloat16)
    for ax in (0, 1):
        out = jax.block_until_ready(pool_reduce(z, axis=ax))
        ref = jnp.sum(z.astype(jnp.float32), axis=ax)
        assert out.shape == ref.shape and out.dtype == z.dtype
        assert jnp.allclose(out.astype(jnp.float32), ref, atol=3e-2, rtol=3e-2)

    print("KERNEL_OK")
</pallas_src>

<mosaic_0001>
module attributes {stable_mosaic.version = 11 : i64} {
  func.func @_sum_rows_kernel(%arg0: i32, %arg1: i32, %arg2: memref<64x128xf32, #tpu.memory_space<vmem>>, %arg3: memref<1x128xf32, #tpu.memory_space<vmem>>, %arg4: memref<8x128xf32, #tpu.memory_space<vmem>>) attributes {dimension_semantics = [#tpu.dimension_semantics<parallel>, #tpu.dimension_semantics<arbitrary>], iteration_bounds = array<i64: 1, 1>, scalar_prefetch = 0 : i64, scratch_operands = 1 : i64, tpu.core_type = #tpu.core_type<tc>, window_params = [{transform_indices = @transform_0, window_bounds = array<i64: 64, 128>}, {transform_indices = @transform_1, window_bounds = array<i64: 1, 128>}]} {
    %c0_i32 = arith.constant 0 : i32
    %0 = arith.cmpi eq, %arg1, %c0_i32 : i32
    %1 = arith.extui %0 : i1 to i32
    %c0_i32_0 = arith.constant 0 : i32
    %2 = arith.cmpi ne, %1, %c0_i32_0 : i32
    scf.if %2 {
      %cst_23 = arith.constant 0.000000e+00 : f32
      %50 = vector.broadcast %cst_23 : f32 to vector<8x128xf32>
      %c0_24 = arith.constant 0 : index
      %c0_25 = arith.constant 0 : index
      %51 = vector.load %arg4[%c0_24, %c0_25] : memref<8x128xf32, #tpu.memory_space<vmem>>, vector<8x128xf32>
      tpu.vector_store %arg4[%c0_24, %c0_25], %50 {strides = array<i32>} : memref<8x128xf32, #tpu.memory_space<vmem>>, vector<8x128xf32>,
    } else {
    }
    %cst = arith.constant 0.000000e+00 : f32
    %3 = vector.broadcast %cst : f32 to vector<8x128xf32>
    %c0_i32_1 = arith.constant 0 : i32
    %c8_i32 = arith.constant 8 : i32
    %4 = arith.muli %c0_i32_1, %c8_i32 : i32
    %5 = tpu.assume_multiple %4, 8 : i32
    %6 = arith.index_cast %5 : i32 to index
    %c0 = arith.constant 0 : index
    %7 = vector.load %arg2[%6, %c0] : memref<64x128xf32, #tpu.memory_space<vmem>>, vector<8x128xf32>
    %8 = arith.addf %3, %7 : vector<8x128xf32>
    %c1_i32 = arith.constant 1 : i32
    %c8_i32_2 = arith.constant 8 : i32
    %9 = arith.muli %c1_i32, %c8_i32_2 : i32
    %10 = tpu.assume_multiple %9, 8 : i32
    %11 = arith.index_cast %10 : i32 to index
    %c0_3 = arith.constant 0 : index
    %12 = vector.load %arg2[%11, %c0_3] : memref<64x128xf32, #tpu.memory_space<vmem>>, vector<8x128xf32>
    %13 = arith.addf %8, %12 : vector<8x128xf32>
    %c2_i32 = arith.constant 2 : i32
    %c8_i32_4 = arith.constant 8 : i32
    %14 = arith.muli %c2_i32, %c8_i32_4 : i32
    %15 = tpu.assume_multiple %14, 8 : i32
    %16 = arith.index_cast %15 : i32 to index
    %c0_5 = arith.constant 0 : index
    %17 = vector.load %arg2[%16, %c0_5] : memref<64x128xf32, #tpu.memory_space<vmem>>, vector<8x128xf32>
    %18 = arith.addf %13, %17 : vector<8x128xf32>
    %c3_i32 = arith.constant 3 : i32
    %c8_i32_6 = arith.constant 8 : i32
    %19 = arith.muli %c3_i32, %c8_i32_6 : i32
    %20 = tpu.assume_multiple %19, 8 : i32
    %21 = arith.index_cast %20 : i32 to index
    %c0_7 = arith.constant 0 : index
    %22 = vector.load %arg2[%21, %c0_7] : memref<64x128xf32, #tpu.memory_space<vmem>>, vector<8x128xf32>
    %23 = arith.addf %18, %22 : vector<8x128xf32>
    %c4_i32 = arith.constant 4 : i32
    %c8_i32_8 = arith.constant 8 : i32
    %24 = arith.muli %c4_i32, %c8_i32_8 : i32
    %25 = tpu.assume_multiple %24, 8 : i32
    %26 = arith.index_cast %25 : i32 to index
    %c0_9 = arith.constant 0 : index
    %27 = vector.load %arg2[%26, %c0_9] : memref<64x128xf32, #tpu.memory_space<vmem>>, vector<8x128xf32>
    %28 = arith.addf %23, %27 : vector<8x128xf32>
    %c5_i32 = arith.constant 5 : i32
    %c8_i32_10 = arith.constant 8 : i32
    %29 = arith.muli %c5_i32, %c8_i32_10 : i32
    %30 = tpu.assume_multiple %29, 8 : i32
    %31 = arith.index_cast %30 : i32 to index
    %c0_11 = arith.constant 0 : index
    %32 = vector.load %arg2[%31, %c0_11] : memref<64x128xf32, #tpu.memory_space<vmem>>, vector<8x128xf32>
    %33 = arith.addf %28, %32 : vector<8x128xf32>
    %c6_i32 = arith.constant 6 : i32
    %c8_i32_12 = arith.constant 8 : i32
    %34 = arith.muli %c6_i32, %c8_i32_12 : i32
    %35 = tpu.assume_multiple %34, 8 : i32
    %36 = arith.index_cast %35 : i32 to index
    %c0_13 = arith.constant 0 : index
    %37 = vector.load %arg2[%36, %c0_13] : memref<64x128xf32, #tpu.memory_space<vmem>>, vector<8x128xf32>
    %38 = arith.addf %33, %37 : vector<8x128xf32>
    %c7_i32 = arith.constant 7 : i32
    %c8_i32_14 = arith.constant 8 : i32
    %39 = arith.muli %c7_i32, %c8_i32_14 : i32
    %40 = tpu.assume_multiple %39, 8 : i32
    %41 = arith.index_cast %40 : i32 to index
    %c0_15 = arith.constant 0 : index
    %42 = vector.load %arg2[%41, %c0_15] : memref<64x128xf32, #tpu.memory_space<vmem>>, vector<8x128xf32>
    %43 = arith.addf %38, %42 : vector<8x128xf32>
    %c8_i32_16 = arith.constant 8 : i32
    %c0_17 = arith.constant 0 : index
    %c0_18 = arith.constant 0 : index
    %44 = vector.load %arg4[%c0_17, %c0_18] : memref<8x128xf32, #tpu.memory_space<vmem>>, vector<8x128xf32>
    %45 = arith.addf %44, %43 : vector<8x128xf32>
    %c0_19 = arith.constant 0 : index
    %c0_20 = arith.constant 0 : index
    %46 = vector.load %arg4[%c0_19, %c0_20] : memref<8x128xf32, #tpu.memory_space<vmem>>, vector<8x128xf32>
    tpu.vector_store %arg4[%c0_19, %c0_20], %45 {strides = array<i32>} : memref<8x128xf32, #tpu.memory_space<vmem>>, vector<8x128xf32>,
    %c0_i32_21 = arith.constant 0 : i32
    %47 = arith.cmpi eq, %arg1, %c0_i32_21 : i32
    %48 = arith.extui %47 : i1 to i32
    %c0_i32_22 = arith.constant 0 : i32
    %49 = arith.cmpi ne, %48, %c0_i32_22 : i32
    scf.if %49 {
      %c0_23 = arith.constant 0 : index
      %c0_24 = arith.constant 0 : index
      %50 = vector.load %arg4[%c0_23, %c0_24] : memref<8x128xf32, #tpu.memory_space<vmem>>, vector<8x128xf32>
      %cst_25 = arith.constant dense<0.000000e+00> : vector<128xf32>
      %51 = vector.multi_reduction <add>, %50, %cst_25 [0] : vector<8x128xf32> to vector<128xf32>
      %52 = vector.shape_cast %51 : vector<128xf32> to vector<1x128xf32>
      %c0_26 = arith.constant 0 : index
      %c0_27 = arith.constant 0 : index
      %53 = vector.load %arg3[%c0_26, %c0_27] : memref<1x128xf32, #tpu.memory_space<vmem>>, vector<1x128xf32>
      tpu.vector_store %arg3[%c0_26, %c0_27], %52 {strides = array<i32>} : memref<1x128xf32, #tpu.memory_space<vmem>>, vector<1x128xf32>,
    } else {
    }
    return
  }
  func.func @transform_0(%arg0: i32, %arg1: i32) -> (i32, i32) {
    %c0_i32 = arith.constant 0 : i32
    return %arg1, %arg0 : i32, i32
  }
  func.func @transform_1(%arg0: i32, %arg1: i32) -> (i32, i32) {
    %c0_i32 = arith.constant 0 : i32
    %c0_i32_0 = arith.constant 0 : i32
    return %c0_i32, %arg0 : i32, i32
  }
}

</mosaic_0001>

<llo_original>
// kernel: pool_reduce.1
$region0: #{pool_reduce.1}
  #allocation0 [shape = 'u32[]', space=smem, size = 0x4, offset = 0x4, fixed_abs, tag = 'smem constant byte address 0x4 - core index']
  #allocation1 [shape = 'u32[144,128]{1,0:T(1,128)}', space=vmem, size = 0x12000, scoped, tag = 'internal scratch']
  #allocation2 [shape = 'f32[8,128]{1,0:T(8,128)}', space=vmem, size = 0x1000, scoped, tag = 'scratch operand']
  %s0 = inlined_call_operand.hbm [shape: f32[64,128], index: 0, kind: input, shape index: {}]
  %s1 = inlined_call_operand.hbm [shape: f32[1,128], index: 1, kind: output, shape index: {}]
  %s2 = sld [smem:[#allocation0]]
  $region26: #{pool_reduce.1} parent=0
    _
  %s4 = ssub.s32 1, %s2
  %s5 = scalar_select 0, %s4, %s2
  $region1: #{pool_reduce.1} parent=0
    #allocation3 [shape = 'u8[32768]{0}', space=vmem, size = 0x8000, scoped, tag = 'input window, operand 0, single buffered']
    #allocation4 [shape = 's32[1]{0}', space=sflag, size = 0x4, scoped, tag = 'scoped memory for pool_reduce.1']
    #allocation5 [shape = 's32[1]{0}', space=sflag, size = 0x4, scoped, tag = 'scoped memory for pool_reduce.1']
    #allocation6 [shape = 'u8[512]{0}', space=vmem, size = 0x400, scoped, tag = 'output window, operand 0, single buffered']
    %6 = vsyncpa [#allocation4], 0
    %7 = vsyncpa [#allocation5], 0
    // Predicated region
    $region2: #{pool_reduce.1} parent=1 // pred_check
      _
    $region3: #{pool_reduce.1} parent=1 // pred_check_branch
      %9 = sbr.rel (0) target = $region5
    $region4: #{pool_reduce.1} parent=1 // pred_region
      %s11 = ssub.s32 1024, 1024
      %12 = vsyncadd [#allocation4], %s11
      %s13 = sshll.u32 [#allocation3], 4
      %s14 = int_to_ptr.vmem [resolvable:$true] %s13
      %19 = dma.hbm_to_vmem [thread:$0]  %s0, 1024, %s14, [#allocation4], 128, 128, 8
    $region5: #{pool_reduce.1} parent=1 // pred_fallthru
      _
    // Predicated region
    $region6: #{pool_reduce.1} parent=1 // pred_check
      _
    $region7: #{pool_reduce.1} parent=1 // pred_check_branch
      %21 = sbr.rel (0) target = $region9
    $region8: #{pool_reduce.1} parent=1 // pred_region
      %22 = dma.done [#allocation4], 1024
    $region9: #{pool_reduce.1} parent=1 // pred_fallthru
      _
    %p23 = scmp.eq.s32.totalorder 0, 0
    // Predicated region
    $region10: #{pool_reduce.1} parent=1 // pred_check
      %p24 = pneg %p23
    $region11: #{pool_reduce.1} parent=1 // pred_check_branch
      %26 = sbr.rel (%p24) target = $region13
    $region12: #{pool_reduce.1} parent=1 // pred_region
      %27 = vst [vmem:[#allocation2] sm:$0xff] 0.0
    $region13: #{pool_reduce.1} parent=1 // pred_fallthru
      _
    %v28 = vld [vmem:[#allocation3] sm:$0xff]
    %v29 = vadd.f32 %v28, 0.0
    %s30 = scalar_lea.vmem [#allocation3], 8
    %v31 = vld [vmem:[%s30] sm:$0xff]
    %v32 = vadd.f32 %v29, %v31
    %s33 = scalar_lea.vmem [#allocation3], 16
    %v34 = vld [vmem:[%s33] sm:$0xff]
    %v35 = vadd.f32 %v32, %v34
    %s36 = scalar_lea.vmem [#allocation3], 24
    %v37 = vld [vmem:[%s36] sm:$0xff]
    %v38 = vadd.f32 %v35, %v37
    %s39 = scalar_lea.vmem [#allocation3], 32
    %v40 = vld [vmem:[%s39] sm:$0xff]
    %v41 = vadd.f32 %v38, %v40
    %s42 = scalar_lea.vmem [#allocation3], 40
    %v43 = vld [vmem:[%s42] sm:$0xff]
    %v44 = vadd.f32 %v41, %v43
    %s45 = scalar_lea.vmem [#allocation3], 48
    %v46 = vld [vmem:[%s45] sm:$0xff]
    %v47 = vadd.f32 %v44, %v46
    %s48 = scalar_lea.vmem [#allocation3], 56
    %v49 = vld [vmem:[%s48] sm:$0xff]
    %v50 = vadd.f32 %v47, %v49
    %v51 = vld [vmem:[#allocation2] sm:$0xff]
    %v52 = vadd.f32 %v51, %v50
    %53 = vst [vmem:[#allocation2] sm:$0xff] %v52
    // Predicated region
    $region14: #{pool_reduce.1} parent=1 // pred_check
      %p54 = pneg %p23
    $region15: #{pool_reduce.1} parent=1 // pred_check_branch
      %56 = sbr.rel (%p54) target = $region17
    $region16: #{pool_reduce.1} parent=1 // pred_region
      %v57 = vld [vmem:[#allocation2] sm:$0xff]
      %v58 = vrot.slane %v57, 4
      %v59 = vadd.f32 %v57, %v58
      %v60 = vrot.slane %v59, 2
      %v61 = vadd.f32 %v59, %v60
      %v62 = vrot.slane %v61, 1
      %v63 = vadd.f32 %v61, %v62
      %64 = vst [vmem:[#allocation6] sm:$0x1] %v63
    $region17: #{pool_reduce.1} parent=1 // pred_fallthru
      _
    // Predicated region
    $region18: #{pool_reduce.1} parent=1 // pred_check
      _
    $region19: #{pool_reduce.1} parent=1 // pred_check_branch
      %66 = sbr.rel (0) target = $region21
    $region20: #{pool_reduce.1} parent=1 // pred_region
      %s68 = ssub.s32 16, 16
      %69 = vsyncadd [#allocation5], %s68
      %s71 = sshll.u32 [#allocation6], 4
      %s72 = int_to_ptr.vmem [resolvable:$true] %s71
      %74 = dma.vmem_to_hbm [thread:$0]  %s72, 16, %s1, [#allocation5]
    $region21: #{pool_reduce.1} parent=1 // pred_fallthru
      _
    // Predicated region
    $region22: #{pool_reduce.1} parent=1 // pred_check
      _
    $region23: #{pool_reduce.1} parent=1 // pred_check_branch
      %76 = sbr.rel (0) target = $region25
    $region24: #{pool_reduce.1} parent=1 // pred_region
      %77 = dma.done [#allocation5], 16
    $region25: #{pool_reduce.1} parent=1 // pred_fallthru
      _
    %78 = vsyncpa [#allocation4], 1
    %79 = vsyncpa [#allocation5], 1

</llo_original>
